<compile_context>
chip_gen: v7x
topology: tpu7x:2x2x1
jax: 0.10.0
libtpu: 0.0.40
codegen_flags: <defaults>
</compile_context>

<pallas_src>
import functools

import jax
import jax.numpy as jnp
from jax.experimental import pallas as pl
from jax.experimental.pallas import tpu as pltpu

LANE = 128
SUBLANE = 8


def _round_up(x, m):
    return ((x + m - 1) // m) * m


def mlp_softmax_kernel(x_ref, w1_ref, b1_ref, w2_ref, b2_ref, o_ref):
    """One batch tile: Linear -> ReLU -> Linear -> softmax(dim=1).

    x_ref : (TILE_B, OBS)   f32  (cast to bf16 in-kernel for the MXU)
    w1_ref: (OBS, H_PAD)    bf16 (padded hidden cols are zero)
    b1_ref: (1, H_PAD)      f32  (padded hidden cols are zero)
    w2_ref: (H_PAD, A_PAD)  bf16 (padded rows/cols are zero)
    b2_ref: (1, A_PAD)      f32  (padded action cols = -1e9 -> exp underflows to 0)
    o_ref : (TILE_B, A_PAD) f32  (lane-dense store; wrapper slices the real actions)
    """
    # bf16 MXU inputs, f32 accumulation, f32 elementwise epilogue.
    x = x_ref[...].astype(w1_ref.dtype)
    h = jnp.dot(x, w1_ref[...], preferred_element_type=jnp.float32)
    h = jnp.maximum(h + b1_ref[...], 0.0)

    # Second Linear (logits). Zero-padded hidden lanes contribute nothing; padded
    # action lanes only see the -1e9 bias and fall out of the softmax.
    logits = jnp.dot(h.astype(w2_ref.dtype), w2_ref[...],
                     preferred_element_type=jnp.float32) + b2_ref[...]

    # Max-stabilized softmax over dim=1 with an EXACT divide so rows sum to 1.
    m = jnp.max(logits, axis=1, keepdims=True)
    e = jnp.exp(logits - m)
    denom = jnp.sum(e, axis=1, keepdims=True)
    o_ref[...] = (e / denom).astype(o_ref.dtype)


def prepare_params(w1, b1, w2, b2):
    """One-time pad + cast of the Linear parameters (do this at model init).

    w1: (obs, hidden), b1: (hidden,), w2: (hidden, n_actions), b2: (n_actions,)
    (weights stored transposed vs torch so the kernel computes x @ W + b).
    """
    obs, hidden = w1.shape
    n_actions = w2.shape[1]
    h_pad = _round_up(hidden, LANE)
    a_pad = _round_up(n_actions, LANE)

    w1p = jnp.zeros((obs, h_pad), jnp.bfloat16).at[:, :hidden].set(w1.astype(jnp.bfloat16))
    b1p = jnp.zeros((1, h_pad), jnp.float32).at[:, :hidden].set(b1.astype(jnp.float32))
    w2p = jnp.zeros((h_pad, a_pad), jnp.bfloat16).at[:hidden, :n_actions].set(
        w2.astype(jnp.bfloat16))
    # Large negative f32 bias on padded action columns: exp() underflows to exactly 0.
    b2p = jnp.full((1, a_pad), -1e9, jnp.float32).at[:, :n_actions].set(
        b2.astype(jnp.float32))

    return {"w1p": w1p, "b1p": b1p, "w2p": w2p, "b2p": b2p,
            "obs": obs, "hidden": hidden, "n_actions": n_actions}


def net_forward(x, params, *, max_tile_b=1024):
    """Pallas implementation of Net.forward: softmax(Linear->ReLU->Linear, dim=1)."""
    batch, obs = x.shape
    w1p, b1p, w2p, b2p = params["w1p"], params["b1p"], params["w2p"], params["b2p"]
    hidden, n_actions = params["hidden"], params["n_actions"]
    h_pad, a_pad = w1p.shape[1], w2p.shape[1]

    # Batch only needs sublane (8) alignment; one grid step unless the batch is huge.
    b_pad = _round_up(batch, SUBLANE)
    if b_pad <= max_tile_b:
        tile_b = b_pad
    else:
        tile_b = max_tile_b
        b_pad = _round_up(b_pad, tile_b)
    xp = x if b_pad == batch else jnp.zeros((b_pad, obs), x.dtype).at[:batch].set(x)

    grid = (b_pad // tile_b,)
    # Cost hint with the real (unpadded) work.
    flops = 2 * batch * (obs * hidden + hidden * n_actions)
    bytes_accessed = (x.size * 4 + w1p.size * 2 + w2p.size * 2
                      + b1p.size * 4 + b2p.size * 4 + batch * n_actions * 4)

    out = pl.pallas_call(
        mlp_softmax_kernel,
        out_shape=jax.ShapeDtypeStruct((b_pad, a_pad), jnp.float32),
        grid=grid,
        in_specs=[
            pl.BlockSpec((tile_b, obs), lambda i: (i, 0)),   # x: tiled over batch
            pl.BlockSpec((obs, h_pad), lambda i: (0, 0)),    # weights/biases resident
            pl.BlockSpec((1, h_pad), lambda i: (0, 0)),
            pl.BlockSpec((h_pad, a_pad), lambda i: (0, 0)),
            pl.BlockSpec((1, a_pad), lambda i: (0, 0)),
        ],
        out_specs=pl.BlockSpec((tile_b, a_pad), lambda i: (i, 0)),
        compiler_params=pltpu.CompilerParams(
            dimension_semantics=("arbitrary",) if grid == (1,) else ("parallel",)),
        cost_estimate=pl.CostEstimate(
            flops=flops,
            transcendentals=batch * n_actions,
            bytes_accessed=bytes_accessed),
    )(xp, w1p, b1p, w2p, b2p)

    return out[:batch, :n_actions]


def reference_forward(x, w1, b1, w2, b2):
    # Mirrors the kernel's bf16-matmul-input / f32-accumulate precision choices.
    xb = x.astype(jnp.bfloat16)
    w1b = w1.astype(jnp.bfloat16)
    w2b = w2.astype(jnp.bfloat16)
    h = jnp.maximum(jnp.dot(xb, w1b, preferred_element_type=jnp.float32) + b1, 0.0)
    logits = jnp.dot(h.astype(jnp.bfloat16), w2b, preferred_element_type=jnp.float32) + b2
    return jax.nn.softmax(logits, axis=1)


if __name__ == "__main__":
    # Shapes consistent with the module: obs_size=32, hidden_size=64, n_actions=16.
    # batch=200 exercises the hidden/action padding paths and a non-128 batch tile.
    batch, obs_size, hidden_size, n_actions = 200, 32, 64, 16

    key = jax.random.PRNGKey(0)
    kx, kw1, kb1, kw2, kb2 = jax.random.split(key, 5)

    x = jax.random.normal(kx, (batch, obs_size), dtype=jnp.float32)

    # Deterministic init mimicking nn.Linear's U(-1/sqrt(fan_in), 1/sqrt(fan_in))
    lim1 = 1.0 / (obs_size ** 0.5)
    lim2 = 1.0 / (hidden_size ** 0.5)
    w1 = jax.random.uniform(kw1, (obs_size, hidden_size), jnp.float32, -lim1, lim1)
    b1 = jax.random.uniform(kb1, (hidden_size,), jnp.float32, -lim1, lim1)
    w2 = jax.random.uniform(kw2, (hidden_size, n_actions), jnp.float32, -lim2, lim2)
    b2 = jax.random.uniform(kb2, (n_actions,), jnp.float32, -lim2, lim2)

    # One-time parameter prep (padding + bf16 cast hoisted out of the forward path).
    params = jax.tree.map(jax.block_until_ready,
                          {k: v for k, v in prepare_params(w1, b1, w2, b2).items()
                           if not isinstance(v, int)})
    params.update({"obs": obs_size, "hidden": hidden_size, "n_actions": n_actions})

    out = jax.block_until_ready(net_forward(x, params))
    ref = reference_forward(x, w1, b1, w2, b2)

    assert out.shape == (batch, n_actions)
    assert bool(jnp.all(jnp.isfinite(out)))
    # bf16 matmul inputs -> compare against the matching reference at a relaxed tol.
    assert jnp.allclose(out, ref, atol=2e-3, rtol=2e-3)
    # Exact divide in the softmax epilogue: rows sum to 1 to f32 rounding.
    assert jnp.allclose(jnp.sum(out, axis=1), jnp.ones((batch,)), atol=1e-5)

    print("KERNEL_OK")
</pallas_src>

<mosaic_0001>
module attributes {stable_mosaic.version = 11 : i64} {
  func.func @mlp_softmax_kernel(%arg0: i32, %arg1: memref<200x32xf32, #tpu.memory_space<vmem>>, %arg2: memref<32x128xbf16, #tpu.memory_space<vmem>>, %arg3: memref<1x128xf32, #tpu.memory_space<vmem>>, %arg4: memref<128x128xbf16, #tpu.memory_space<vmem>>, %arg5: memref<1x128xf32, #tpu.memory_space<vmem>>, %arg6: memref<200x128xf32, #tpu.memory_space<vmem>>) attributes {dimension_semantics = [#tpu.dimension_semantics<arbitrary>], iteration_bounds = array<i64: 1>, scalar_prefetch = 0 : i64, scratch_operands = 0 : i64, tpu.core_type = #tpu.core_type<tc>, window_params = [{transform_indices = @transform_0, window_bounds = array<i64: 200, 32>}, {pipeline_mode = #tpu.pipeline_mode<synchronous>, transform_indices = @transform_1, window_bounds = array<i64: 32, 128>}, {pipeline_mode = #tpu.pipeline_mode<synchronous>, transform_indices = @transform_2, window_bounds = array<i64: 1, 128>}, {pipeline_mode = #tpu.pipeline_mode<synchronous>, transform_indices = @transform_3, window_bounds = array<i64: 128, 128>}, {pipeline_mode = #tpu.pipeline_mode<synchronous>, transform_indices = @transform_4, window_bounds = array<i64: 1, 128>}, {transform_indices = @transform_5, window_bounds = array<i64: 200, 128>}]} {
    %c0 = arith.constant 0 : index
    %c0_0 = arith.constant 0 : index
    %0 = vector.load %arg1[%c0, %c0_0] : memref<200x32xf32, #tpu.memory_space<vmem>>, vector<200x32xf32>
    %1 = arith.truncf %0 : vector<200x32xf32> to vector<200x32xbf16>
    %c0_1 = arith.constant 0 : index
    %c0_2 = arith.constant 0 : index
    %2 = vector.load %arg2[%c0_1, %c0_2] : memref<32x128xbf16, #tpu.memory_space<vmem>>, vector<32x128xbf16>
    %cst = arith.constant dense<0.000000e+00> : vector<200x128xf32>
    %3 = tpu.matmul %1, %2, %cst {dimension_numbers = #tpu.dot_dimension_numbers<[1], [0], [0], [1], [0, 0, 1, 1], [], []>} : vector<200x32xbf16>, vector<32x128xbf16>, vector<200x128xf32> -> vector<200x128xf32>
    %c0_3 = arith.constant 0 : index
    %c0_4 = arith.constant 0 : index
    %4 = vector.load %arg3[%c0_3, %c0_4] : memref<1x128xf32, #tpu.memory_space<vmem>>, vector<1x128xf32>
    %5 = vector.broadcast %4 : vector<1x128xf32> to vector<200x128xf32>
    %6 = arith.addf %3, %5 : vector<200x128xf32>
    %cst_5 = arith.constant 0.000000e+00 : f32
    %7 = vector.broadcast %cst_5 : f32 to vector<200x128xf32>
    %8 = arith.maximumf %6, %7 : vector<200x128xf32>
    %9 = arith.truncf %8 : vector<200x128xf32> to vector<200x128xbf16>
    %c0_6 = arith.constant 0 : index
    %c0_7 = arith.constant 0 : index
    %10 = vector.load %arg4[%c0_6, %c0_7] : memref<128x128xbf16, #tpu.memory_space<vmem>>, vector<128x128xbf16>
    %cst_8 = arith.constant dense<0.000000e+00> : vector<200x128xf32>
    %11 = tpu.matmul %9, %10, %cst_8 {dimension_numbers = #tpu.dot_dimension_numbers<[1], [0], [0], [1], [0, 0, 1, 1], [], []>} : vector<200x128xbf16>, vector<128x128xbf16>, vector<200x128xf32> -> vector<200x128xf32>
    %c0_9 = arith.constant 0 : index
    %c0_10 = arith.constant 0 : index
    %12 = vector.load %arg5[%c0_9, %c0_10] : memref<1x128xf32, #tpu.memory_space<vmem>>, vector<1x128xf32>
    %13 = vector.broadcast %12 : vector<1x128xf32> to vector<200x128xf32>
    %14 = arith.addf %11, %13 : vector<200x128xf32>
    %cst_11 = arith.constant dense<0xFF800000> : vector<200xf32>
    %15 = vector.multi_reduction <maximumf>, %14, %cst_11 [1] : vector<200x128xf32> to vector<200xf32>
    %16 = vector.shape_cast %15 : vector<200xf32> to vector<200x1xf32>
    %17 = vector.broadcast %16 : vector<200x1xf32> to vector<200x128xf32>
    %18 = arith.subf %14, %17 : vector<200x128xf32>
    %19 = math.exp %18 : vector<200x128xf32>
    %cst_12 = arith.constant dense<0.000000e+00> : vector<200xf32>
    %20 = vector.multi_reduction <add>, %19, %cst_12 [1] : vector<200x128xf32> to vector<200xf32>
    %21 = vector.shape_cast %20 : vector<200xf32> to vector<200x1xf32>
    %22 = vector.broadcast %21 : vector<200x1xf32> to vector<200x128xf32>
    %23 = arith.divf %19, %22 : vector<200x128xf32>
    %c0_13 = arith.constant 0 : index
    %c0_14 = arith.constant 0 : index
    %24 = vector.load %arg6[%c0_13, %c0_14] : memref<200x128xf32, #tpu.memory_space<vmem>>, vector<200x128xf32>
    tpu.vector_store %arg6[%c0_13, %c0_14], %23 {strides = array<i32>} : memref<200x128xf32, #tpu.memory_space<vmem>>, vector<200x128xf32>,
    return
  }
  func.func @transform_0(%arg0: i32) -> (i32, i32) {
    %c0_i32 = arith.constant 0 : i32
    %c0_i32_0 = arith.constant 0 : i32
    return %arg0, %c0_i32 : i32, i32
  }
  func.func @transform_1(%arg0: i32) -> (i32, i32) {
    %c0_i32 = arith.constant 0 : i32
    %c0_i32_0 = arith.constant 0 : i32
    %c0_i32_1 = arith.constant 0 : i32
    return %c0_i32, %c0_i32_0 : i32, i32
  }
  func.func @transform_2(%arg0: i32) -> (i32, i32) {
    %c0_i32 = arith.constant 0 : i32
    %c0_i32_0 = arith.constant 0 : i32
    %c0_i32_1 = arith.constant 0 : i32
    return %c0_i32, %c0_i32_0 : i32, i32
  }
  func.func @transform_3(%arg0: i32) -> (i32, i32) {
    %c0_i32 = arith.constant 0 : i32
    %c0_i32_0 = arith.constant 0 : i32
    %c0_i32_1 = arith.constant 0 : i32
    return %c0_i32, %c0_i32_0 : i32, i32
  }
  func.func @transform_4(%arg0: i32) -> (i32, i32) {
    %c0_i32 = arith.constant 0 : i32
    %c0_i32_0 = arith.constant 0 : i32
    %c0_i32_1 = arith.constant 0 : i32
    return %c0_i32, %c0_i32_0 : i32, i32
  }
  func.func @transform_5(%arg0: i32) -> (i32, i32) {
    %c0_i32 = arith.constant 0 : i32
    %c0_i32_0 = arith.constant 0 : i32
    return %arg0, %c0_i32 : i32, i32
  }
}

</mosaic_0001>

<llo_original>
// kernel: tpu_custom_call.1
$region0: #{tpu_custom_call.1}
  #allocation0 [shape = 'u32[]', space=smem, size = 0x4, offset = 0x4, fixed_abs, tag = 'smem constant byte address 0x4 - core index']
  #allocation1 [shape = 'u32[144,128]{1,0:T(1,128)}', space=vmem, size = 0x12000, scoped, tag = 'internal scratch']
  %s0 = inlined_call_operand.vmem [shape: f32[200,32], index: 0, kind: input, shape index: {}]
  %s1 = inlined_call_operand.vmem [shape: bf16[32,128], index: 1, kind: input, shape index: {}]
  %s2 = inlined_call_operand.vmem [shape: f32[1,128], index: 2, kind: input, shape index: {}]
  %s3 = inlined_call_operand.vmem [shape: bf16[128,128], index: 3, kind: input, shape index: {}]
  %s4 = inlined_call_operand.vmem [shape: f32[1,128], index: 4, kind: input, shape index: {}]
  %s5 = inlined_call_operand.hbm [shape: f32[200,128], index: 5, kind: output, shape index: {}]
  %s6 = sld [smem:[#allocation0]]
  $region30: #{tpu_custom_call.1} parent=0
    _
  %s8 = ssub.s32 1, %s6
  %s9 = scalar_select 0, %s8, %s6
  $region1: #{tpu_custom_call.1} parent=0
    #allocation2 [shape = 'u8[102400]{0}', space=vmem, size = 0x19000, scoped, tag = 'output window, operand 0, single buffered']
    #allocation3 [shape = 's32[1]{0}', space=sflag, size = 0x4, scoped, tag = 'scoped memory for tpu_custom_call.1']
    %10 = vsyncpa [#allocation3], 0
    // Predicated region
    $region2: #{tpu_custom_call.1} parent=1 // pred_check
      _
    $region3: #{tpu_custom_call.1} parent=1 // pred_check_branch
      %12 = sbr.rel (0) target = $region5
    $region4: #{tpu_custom_call.1} parent=1 // pred_region
      _
    $region5: #{tpu_custom_call.1} parent=1 // pred_fallthru
      _
    // Predicated region
    $region6: #{tpu_custom_call.1} parent=1 // pred_check
      _
    $region7: #{tpu_custom_call.1} parent=1 // pred_check_branch
      %14 = sbr.rel (0) target = $region9
    $region8: #{tpu_custom_call.1} parent=1 // pred_region
      _
    $region9: #{tpu_custom_call.1} parent=1 // pred_fallthru
      _
    // Predicated region
    $region10: #{tpu_custom_call.1} parent=1 // pred_check
      _
    $region11: #{tpu_custom_call.1} parent=1 // pred_check_branch
      %16 = sbr.rel (0) target = $region13
    $region12: #{tpu_custom_call.1} parent=1 // pred_region
      _
    $region13: #{tpu_custom_call.1} parent=1 // pred_fallthru
      _
    // Predicated region
    $region14: #{tpu_custom_call.1} parent=1 // pred_check
      _
    $region15: #{tpu_custom_call.1} parent=1 // pred_check_branch
      %18 = sbr.rel (0) target = $region17
    $region16: #{tpu_custom_call.1} parent=1 // pred_region
      _
    $region17: #{tpu_custom_call.1} parent=1 // pred_fallthru
      _
    // Predicated region
    $region18: #{tpu_custom_call.1} parent=1 // pred_check
      _
    $region19: #{tpu_custom_call.1} parent=1 // pred_check_branch
      %20 = sbr.rel (0) target = $region21
    $region20: #{tpu_custom_call.1} parent=1 // pred_region
      _
    $region21: #{tpu_custom_call.1} parent=1 // pred_fallthru
      _
    %v22 = vld [vmem:[%s0] sm:$0xff]
    %v23 = vld [vmem:[%s0 + $0x8] sm:$0xff]
    %v24 = vld [vmem:[%s0 + $0x10] sm:$0xff]
    %v25 = vld [vmem:[%s0 + $0x18] sm:$0xff]
    %v26 = vld [vmem:[%s0 + $0x20] sm:$0xff]
    %v27 = vld [vmem:[%s0 + $0x28] sm:$0xff]
    %v28 = vld [vmem:[%s0 + $0x30] sm:$0xff]
    %v29 = vld [vmem:[%s0 + $0x38] sm:$0xff]
    %v30 = vld [vmem:[%s0 + $0x40] sm:$0xff]
    %v31 = vld [vmem:[%s0 + $0x48] sm:$0xff]
    %v32 = vld [vmem:[%s0 + $0x50] sm:$0xff]
    %v33 = vld [vmem:[%s0 + $0x58] sm:$0xff]
    %v34 = vld [vmem:[%s0 + $0x60] sm:$0xff]
    %v35 = vld [vmem:[%s0 + $0x68] sm:$0xff]
    %v36 = vld [vmem:[%s0 + $0x70] sm:$0xff]
    %v37 = vld [vmem:[%s0 + $0x78] sm:$0xff]
    %v38 = vld [vmem:[%s0 + $0x80] sm:$0xff]
    %v39 = vld [vmem:[%s0 + $0x88] sm:$0xff]
    %v40 = vld [vmem:[%s0 + $0x90] sm:$0xff]
    %v41 = vld [vmem:[%s0 + $0x98] sm:$0xff]
    %v42 = vld [vmem:[%s0 + $0xa0] sm:$0xff]
    %v43 = vld [vmem:[%s0 + $0xa8] sm:$0xff]
    %v44 = vld [vmem:[%s0 + $0xb0] sm:$0xff]
    %v45 = vld [vmem:[%s0 + $0xb8] sm:$0xff]
    %v46 = vld [vmem:[%s0 + $0xc0] sm:$0xff]
    %v47 = vpack.c.bf16 %v23, %v22
    %v48 = vpack.c.bf16 %v25, %v24
    %v49 = vpack.c.bf16 %v27, %v26
    %v50 = vpack.c.bf16 %v29, %v28
    %v51 = vpack.c.bf16 %v31, %v30
    %v52 = vpack.c.bf16 %v33, %v32
    %v53 = vpack.c.bf16 %v35, %v34
    %v54 = vpack.c.bf16 %v37, %v36
    %v55 = vpack.c.bf16 %v39, %v38
    %v56 = vpack.c.bf16 %v41, %v40
    %v57 = vpack.c.bf16 %v43, %v42
    %v58 = vpack.c.bf16 %v45, %v44
    %v59 = vpack.c.bf16 %v46, %v46
    %v60 = vld [vmem:[%s1] sm:$0xf]
    %v61 = vld [vmem:[%s1 + $0x4] sm:$0xf]
    %v62 = vld [vmem:[%s1 + $0x8] sm:$0xf]
    %v63 = vld [vmem:[%s1 + $0xc] sm:$0xf]
    %v64 = vld [vmem:[%s2] sm:$0x1]
    %v66 = vlaneseq
    %v67 = vshrl.u32 %v66, 7
    %v68 = vsub.s32 0, %v67
    %v69 = vrot.slane %v64, %v68
    %v75 = vunpack.c.l.b16 %v60
    %v76 = vunpack.c.l.b16 %v61
    %v77 = vunpack.c.l.b16 %v62
    %v78 = vunpack.c.l.b16 %v63
    %v79 = vpack.c.b16 %v76, %v75
    %v80 = vpack.c.b16 %v78, %v77
    %vm83 = vcmask 261120
    %v85 = vsel %vm83, %v47, 0
    %v88 = vsel %vm83, %v48, 0
    %v91 = vsel %vm83, %v49, 0
    %v94 = vsel %vm83, %v50, 0
    %v97 = vsel %vm83, %v51, 0
    %v100 = vsel %vm83, %v52, 0
    %v103 = vsel %vm83, %v53, 0
    %v106 = vsel %vm83, %v54, 0
    %v109 = vsel %vm83, %v55, 0
    %v112 = vsel %vm83, %v56, 0
    %v115 = vsel %vm83, %v57, 0
    %v118 = vsel %vm83, %v58, 0
    %v121 = vsel %vm83, %v59, 0
    %123 = vmatprep.subr.bf16.mxu0 0
    %124 = vmatpush1.bf16.msra.mxu0 %v79
    %125 = vmatprep.subr.bf16.mxu0 0
    %126 = vmatpush1.bf16.msra.mxu0 %v80
    %127 = vmatprep.subr.bf16.mxu0 0
    %128 = vmatpush1.bf16.msra.mxu0 0
    %129 = vmatprep.subr.bf16.mxu0 0
    %130 = vmatpush1.bf16.msra.mxu0 0
    %131 = vmatprep.subr.bf16.mxu0 0
    %132 = vmatpush1.bf16.msra.mxu0 0
    %133 = vmatprep.subr.bf16.mxu0 0
    %134 = vmatpush1.bf16.msra.mxu0 0
    %135 = vmatprep.subr.bf16.mxu0 0
    %136 = vmatpush1.bf16.msra.mxu0 0
    %137 = vmatprep.subr.bf16.mxu0 0
    %138 = vmatpush1.bf16.msra.mxu0 0
    %139 = vmatprep.subr.bf16.mxu0 0
    %140 = vmatpush1.bf16.msra.mxu0 0
    %141 = vmatprep.subr.bf16.mxu0 0
    %142 = vmatpush1.bf16.msra.mxu0 0
    %143 = vmatprep.subr.bf16.mxu0 0
    %144 = vmatpush1.bf16.msra.mxu0 0
    %145 = vmatprep.subr.bf16.mxu0 0
    %146 = vmatpush1.bf16.msra.mxu0 0
    %147 = vmatprep.subr.bf16.mxu0 0
    %148 = vmatpush1.bf16.msra.mxu0 0
    %149 = vmatprep.subr.bf16.mxu0 0
    %150 = vmatpush1.bf16.msra.mxu0 0
    %151 = vmatprep.subr.bf16.mxu0 0
    %152 = vmatpush1.bf16.msra.mxu0 0
    %153 = vmatprep.subr.bf16.mxu0 0
    %154 = vmatpush1.bf16.msra.mxu0 0
    %155 = vmatprep.mubr.bf16.mxu0 0
    %156 = vmatmul.mubr.bf16.gmra.mrb[0].mxu0 %v85
    %v157 = vpop.f32.mrb[0].mxu0
    %v158 = vadd.f32 %v69, %v157
    %v159 = vpop.f32.mrb[0].mxu0
    %v160 = vpop.f32.mrb[0].mxu0
    %v161 = vadd.f32 %v69, %v160
    %v162 = vpop.f32.mrb[0].mxu0
    %163 = vmatprep.mubr.bf16.mxu0 0
    %164 = vmatmul.mubr.bf16.gmra.mrb[0].mxu0 %v88
    %v165 = vpop.f32.mrb[0].mxu0
    %v166 = vadd.f32 %v69, %v165
    %v167 = vpop.f32.mrb[0].mxu0
    %v168 = vpop.f32.mrb[0].mxu0
    %v169 = vadd.f32 %v69, %v168
    %v170 = vpop.f32.mrb[0].mxu0
    %171 = vmatprep.mubr.bf16.mxu0 0
    %172 = vmatmul.mubr.bf16.gmra.mrb[0].mxu0 %v91
    %v173 = vpop.f32.mrb[0].mxu0
    %v174 = vadd.f32 %v69, %v173
    %v175 = vpop.f32.mrb[0].mxu0
    %v176 = vpop.f32.mrb[0].mxu0
    %v177 = vadd.f32 %v69, %v176
    %v178 = vpop.f32.mrb[0].mxu0
    %179 = vmatprep.mubr.bf16.mxu0 0
    %180 = vmatmul.mubr.bf16.gmra.mrb[0].mxu0 %v94
    %v181 = vpop.f32.mrb[0].mxu0
    %v182 = vadd.f32 %v69, %v181
    %v183 = vpop.f32.mrb[0].mxu0
    %v184 = vpop.f32.mrb[0].mxu0
    %v185 = vadd.f32 %v69, %v184
    %v186 = vpop.f32.mrb[0].mxu0
    %187 = vmatprep.mubr.bf16.mxu0 0
    %188 = vmatmul.mubr.bf16.gmra.mrb[0].mxu0 %v97
    %v189 = vpop.f32.mrb[0].mxu0
    %v190 = vadd.f32 %v69, %v189
    %v191 = vpop.f32.mrb[0].mxu0
    %v192 = vpop.f32.mrb[0].mxu0
    %v193 = vadd.f32 %v69, %v192
    %v194 = vpop.f32.mrb[0].mxu0
    %195 = vmatprep.mubr.bf16.mxu0 0
    %196 = vmatmul.mubr.bf16.gmra.mrb[0].mxu0 %v100
    %v197 = vpop.f32.mrb[0].mxu0
    %v198 = vadd.f32 %v69, %v197
    %v199 = vpop.f32.mrb[0].mxu0
    %v200 = vpop.f32.mrb[0].mxu0
    %v201 = vadd.f32 %v69, %v200
    %v202 = vpop.f32.mrb[0].mxu0
    %203 = vmatprep.mubr.bf16.mxu0 0
    %204 = vmatmul.mubr.bf16.gmra.mrb[0].mxu0 %v103
    %v205 = vpop.f32.mrb[0].mxu0
    %v206 = vadd.f32 %v69, %v205
    %v207 = vpop.f32.mrb[0].mxu0
    %v208 = vpop.f32.mrb[0].mxu0
    %v209 = vadd.f32 %v69, %v208
    %v210 = vpop.f32.mrb[0].mxu0
    %211 = vmatprep.mubr.bf16.mxu0 0
    %212 = vmatmul.mubr.bf16.gmra.mrb[0].mxu0 %v106
    %v213 = vpop.f32.mrb[0].mxu0
    %v214 = vadd.f32 %v69, %v213
    %v215 = vpop.f32.mrb[0].mxu0
    %v216 = vpop.f32.mrb[0].mxu0
    %v217 = vadd.f32 %v69, %v216
    %v218 = vpop.f32.mrb[0].mxu0
    %219 = vmatprep.mubr.bf16.mxu0 0
    %220 = vmatmul.mubr.bf16.gmra.mrb[0].mxu0 %v109
    %v221 = vpop.f32.mrb[0].mxu0
    %v222 = vadd.f32 %v69, %v221
    %v223 = vpop.f32.mrb[0].mxu0
    %v224 = vpop.f32.mrb[0].mxu0
    %v225 = vadd.f32 %v69, %v224
    %v226 = vpop.f32.mrb[0].mxu0
    %227 = vmatprep.mubr.bf16.mxu0 0
    %228 = vmatmul.mubr.bf16.gmra.mrb[0].mxu0 %v112
    %v229 = vpop.f32.mrb[0].mxu0
    %v230 = vadd.f32 %v69, %v229
    %v231 = vpop.f32.mrb[0].mxu0
    %v232 = vpop.f32.mrb[0].mxu0
    %v233 = vadd.f32 %v69, %v232
    %v234 = vpop.f32.mrb[0].mxu0
    %235 = vmatprep.mubr.bf16.mxu0 0
    %236 = vmatmul.mubr.bf16.gmra.mrb[0].mxu0 %v115
    %v237 = vpop.f32.mrb[0].mxu0
    %v238 = vadd.f32 %v69, %v237
    %v239 = vpop.f32.mrb[0].mxu0
    %v240 = vpop.f32.mrb[0].mxu0
    %v241 = vadd.f32 %v69, %v240
    %v242 = vpop.f32.mrb[0].mxu0
    %243 = vmatprep.mubr.bf16.mxu0 0
    %244 = vmatmul.mubr.bf16.gmra.mrb[0].mxu0 %v118
    %v245 = vpop.f32.mrb[0].mxu0
    %v246 = vadd.f32 %v69, %v245
    %v247 = vpop.f32.mrb[0].mxu0
    %v248 = vpop.f32.mrb[0].mxu0
    %v249 = vadd.f32 %v69, %v248
    %v250 = vpop.f32.mrb[0].mxu0
    %251 = vmatprep.mubr.bf16.mxu0 0
    %252 = vmatmul.mubr.bf16.gmra.mrb[0].mxu0 %v121
    %v253 = vpop.f32.mrb[0].mxu0
    %v254 = vadd.f32 %v69, %v253
    %v255 = vpop.f32.mrb[0].mxu0
    %v256 = vpop.f32.mrb[0].mxu0
    %v257 = vpop.f32.mrb[0].mxu0
    %258 = vdwg.mxu0
    %v259 = vmax.f32 %v158, 0.0
    %v260 = vmax.f32 %v161, 0.0
    %v261 = vmax.f32 %v166, 0.0
    %v262 = vmax.f32 %v169, 0.0
    %v263 = vmax.f32 %v174, 0.0
    %v264 = vmax.f32 %v177, 0.0
    %v265 = vmax.f32 %v182, 0.0
    %v266 = vmax.f32 %v185, 0.0
    %v267 = vmax.f32 %v190, 0.0
    %v268 = vmax.f32 %v193, 0.0
    %v269 = vmax.f32 %v198, 0.0
    %v270 = vmax.f32 %v201, 0.0
    %v271 = vmax.f32 %v206, 0.0
    %v272 = vmax.f32 %v209, 0.0
    %v273 = vmax.f32 %v214, 0.0
    %v274 = vmax.f32 %v217, 0.0
    %v275 = vmax.f32 %v222, 0.0
    %v276 = vmax.f32 %v225, 0.0
    %v277 = vmax.f32 %v230, 0.0
    %v278 = vmax.f32 %v233, 0.0
    %v279 = vmax.f32 %v238, 0.0
    %v280 = vmax.f32 %v241, 0.0
    %v281 = vmax.f32 %v246, 0.0
    %v282 = vmax.f32 %v249, 0.0
    %v283 = vmax.f32 %v254, 0.0
    %v284 = vpack.c.bf16 %v260, %v259
    %v285 = vpack.c.bf16 %v262, %v261
    %v286 = vpack.c.bf16 %v264, %v263
    %v287 = vpack.c.bf16 %v266, %v265
    %v288 = vpack.c.bf16 %v268, %v267
    %v289 = vpack.c.bf16 %v270, %v269
    %v290 = vpack.c.bf16 %v272, %v271
    %v291 = vpack.c.bf16 %v274, %v273
    %v292 = vpack.c.bf16 %v276, %v275
    %v293 = vpack.c.bf16 %v278, %v277
    %v294 = vpack.c.bf16 %v280, %v279
    %v295 = vpack.c.bf16 %v282, %v281
    %v296 = vpack.c.bf16 %v283, %v283
    %v297 = vld [vmem:[%s3] sm:$0xf]
    %v298 = vld [vmem:[%s3 + $0x4] sm:$0xf]
    %v299 = vld [vmem:[%s3 + $0x8] sm:$0xf]
    %v300 = vld [vmem:[%s3 + $0xc] sm:$0xf]
    %v301 = vld [vmem:[%s3 + $0x10] sm:$0xf]
    %v302 = vld [vmem:[%s3 + $0x14] sm:$0xf]
    %v303 = vld [vmem:[%s3 + $0x18] sm:$0xf]
    %v304 = vld [vmem:[%s3 + $0x1c] sm:$0xf]
    %v305 = vld [vmem:[%s3 + $0x20] sm:$0xf]
    %v306 = vld [vmem:[%s3 + $0x24] sm:$0xf]
    %v307 = vld [vmem:[%s3 + $0x28] sm:$0xf]
    %v308 = vld [vmem:[%s3 + $0x2c] sm:$0xf]
    %v309 = vld [vmem:[%s3 + $0x30] sm:$0xf]
    %v310 = vld [vmem:[%s3 + $0x34] sm:$0xf]
    %v311 = vld [vmem:[%s3 + $0x38] sm:$0xf]
    %v312 = vld [vmem:[%s3 + $0x3c] sm:$0xf]
    %v313 = vld [vmem:[%s4] sm:$0x1]
    %v315 = vlaneseq
    %v316 = vshrl.u32 %v315, 7
    %v317 = vsub.s32 0, %v316
    %v318 = vrot.slane %v313, %v317
    %v336 = vunpack.c.l.b16 %v297
    %v337 = vunpack.c.l.b16 %v298
    %v338 = vunpack.c.l.b16 %v299
    %v339 = vunpack.c.l.b16 %v300
    %v340 = vunpack.c.l.b16 %v301
    %v341 = vunpack.c.l.b16 %v302
    %v342 = vunpack.c.l.b16 %v303
    %v343 = vunpack.c.l.b16 %v304
    %v344 = vunpack.c.l.b16 %v305
    %v345 = vunpack.c.l.b16 %v306
    %v346 = vunpack.c.l.b16 %v307
    %v347 = vunpack.c.l.b16 %v308
    %v348 = vunpack.c.l.b16 %v309
    %v349 = vunpack.c.l.b16 %v310
    %v350 = vunpack.c.l.b16 %v311
    %v351 = vunpack.c.l.b16 %v312
    %v352 = vpack.c.b16 %v337, %v336
    %v353 = vpack.c.b16 %v339, %v338
    %v354 = vpack.c.b16 %v341, %v340
    %v355 = vpack.c.b16 %v343, %v342
    %v356 = vpack.c.b16 %v345, %v344
    %v357 = vpack.c.b16 %v347, %v346
    %v358 = vpack.c.b16 %v349, %v348
    %v359 = vpack.c.b16 %v351, %v350
    %368 = vmatprep.subr.bf16.mxu0 0
    %369 = vmatpush1.bf16.msra.mxu0 %v352
    %370 = vmatprep.subr.bf16.mxu0 0
    %371 = vmatpush1.bf16.msra.mxu0 %v353
    %372 = vmatprep.subr.bf16.mxu0 0
    %373 = vmatpush1.bf16.msra.mxu0 %v354
    %374 = vmatprep.subr.bf16.mxu0 0
    %375 = vmatpush1.bf16.msra.mxu0 %v355
    %376 = vmatprep.subr.bf16.mxu0 0
    %377 = vmatpush1.bf16.msra.mxu0 %v356
    %378 = vmatprep.subr.bf16.mxu0 0
    %379 = vmatpush1.bf16.msra.mxu0 %v357
    %380 = vmatprep.subr.bf16.mxu0 0
    %381 = vmatpush1.bf16.msra.mxu0 %v358
    %382 = vmatprep.subr.bf16.mxu0 0
    %383 = vmatpush1.bf16.msra.mxu0 %v359
    %384 = vmatprep.subr.bf16.mxu0 0
    %385 = vmatpush1.bf16.msra.mxu0 0
    %386 = vmatprep.subr.bf16.mxu0 0
    %387 = vmatpush1.bf16.msra.mxu0 0
    %388 = vmatprep.subr.bf16.mxu0 0
    %389 = vmatpush1.bf16.msra.mxu0 0
    %390 = vmatprep.subr.bf16.mxu0 0
    %391 = vmatpush1.bf16.msra.mxu0 0
    %392 = vmatprep.subr.bf16.mxu0 0
    %393 = vmatpush1.bf16.msra.mxu0 0
    %394 = vmatprep.subr.bf16.mxu0 0
    %395 = vmatpush1.bf16.msra.mxu0 0
    %396 = vmatprep.subr.bf16.mxu0 0
    %397 = vmatpush1.bf16.msra.mxu0 0
    %398 = vmatprep.subr.bf16.mxu0 0
    %399 = vmatpush1.bf16.msra.mxu0 0
    %400 = vmatprep.mubr.bf16.mxu0 0
    %401 = vmatmul.mubr.bf16.gmra.mrb[0].mxu0 %v284
    %v402 = vpop.f32.mrb[0].mxu0
    %v403 = vadd.f32 %v318, %v402
    %v404 = vpop.f32.mrb[0].mxu0
    %v405 = vpop.f32.mrb[0].mxu0
    %v406 = vadd.f32 %v318, %v405
    %v407 = vpop.f32.mrb[0].mxu0
    %408 = vmatprep.mubr.bf16.mxu0 0
    %409 = vmatmul.mubr.bf16.gmra.mrb[0].mxu0 %v285
    %v410 = vpop.f32.mrb[0].mxu0
    %v411 = vadd.f32 %v318, %v410
    %v412 = vpop.f32.mrb[0].mxu0
    %v413 = vpop.f32.mrb[0].mxu0
    %v414 = vadd.f32 %v318, %v413
    %v415 = vpop.f32.mrb[0].mxu0
    %416 = vmatprep.mubr.bf16.mxu0 0
    %417 = vmatmul.mubr.bf16.gmra.mrb[0].mxu0 %v286
    %v418 = vpop.f32.mrb[0].mxu0
    %v419 = vadd.f32 %v318, %v418
    %v420 = vpop.f32.mrb[0].mxu0
    %v421 = vpop.f32.mrb[0].mxu0
    %v422 = vadd.f32 %v318, %v421
    %v423 = vpop.f32.mrb[0].mxu0
    %424 = vmatprep.mubr.bf16.mxu0 0
    %425 = vmatmul.mubr.bf16.gmra.mrb[0].mxu0 %v287
    %v426 = vpop.f32.mrb[0].mxu0
    %v427 = vadd.f32 %v318, %v426
    %v428 = vpop.f32.mrb[0].mxu0
    %v429 = vpop.f32.mrb[0].mxu0
    %v430 = vadd.f32 %v318, %v429
    %v431 = vpop.f32.mrb[0].mxu0
    %432 = vmatprep.mubr.bf16.mxu0 0
    %433 = vmatmul.mubr.bf16.gmra.mrb[0].mxu0 %v288
    %v434 = vpop.f32.mrb[0].mxu0
    %v435 = vadd.f32 %v318, %v434
    %v436 = vpop.f32.mrb[0].mxu0
    %v437 = vpop.f32.mrb[0].mxu0
    %v438 = vadd.f32 %v318, %v437
    %v439 = vpop.f32.mrb[0].mxu0
    %440 = vmatprep.mubr.bf16.mxu0 0
    %441 = vmatmul.mubr.bf16.gmra.mrb[0].mxu0 %v289
    %v442 = vpop.f32.mrb[0].mxu0
    %v443 = vadd.f32 %v318, %v442
    %v444 = vpop.f32.mrb[0].mxu0
    %v445 = vpop.f32.mrb[0].mxu0
    %v446 = vadd.f32 %v318, %v445
    %v447 = vpop.f32.mrb[0].mxu0
    %448 = vmatprep.mubr.bf16.mxu0 0
    %449 = vmatmul.mubr.bf16.gmra.mrb[0].mxu0 %v290
    %v450 = vpop.f32.mrb[0].mxu0
    %v451 = vadd.f32 %v318, %v450
    %v452 = vpop.f32.mrb[0].mxu0
    %v453 = vpop.f32.mrb[0].mxu0
    %v454 = vadd.f32 %v318, %v453
    %v455 = vpop.f32.mrb[0].mxu0
    %456 = vmatprep.mubr.bf16.mxu0 0
    %457 = vmatmul.mubr.bf16.gmra.mrb[0].mxu0 %v291
    %v458 = vpop.f32.mrb[0].mxu0
    %v459 = vadd.f32 %v318, %v458
    %v460 = vpop.f32.mrb[0].mxu0
    %v461 = vpop.f32.mrb[0].mxu0
    %v462 = vadd.f32 %v318, %v461
    %v463 = vpop.f32.mrb[0].mxu0
    %464 = vmatprep.mubr.bf16.mxu0 0
    %465 = vmatmul.mubr.bf16.gmra.mrb[0].mxu0 %v292
    %v466 = vpop.f32.mrb[0].mxu0
    %v467 = vadd.f32 %v318, %v466
    %v468 = vpop.f32.mrb[0].mxu0
    %v469 = vpop.f32.mrb[0].mxu0
    %v470 = vadd.f32 %v318, %v469
    %v471 = vpop.f32.mrb[0].mxu0
    %472 = vmatprep.mubr.bf16.mxu0 0
    %473 = vmatmul.mubr.bf16.gmra.mrb[0].mxu0 %v293
    %v474 = vpop.f32.mrb[0].mxu0
    %v475 = vadd.f32 %v318, %v474
    %v476 = vpop.f32.mrb[0].mxu0
    %v477 = vpop.f32.mrb[0].mxu0
    %v478 = vadd.f32 %v318, %v477
    %v479 = vpop.f32.mrb[0].mxu0
    %480 = vmatprep.mubr.bf16.mxu0 0
    %481 = vmatmul.mubr.bf16.gmra.mrb[0].mxu0 %v294
    %v482 = vpop.f32.mrb[0].mxu0
    %v483 = vadd.f32 %v318, %v482
    %v484 = vpop.f32.mrb[0].mxu0
    %v485 = vpop.f32.mrb[0].mxu0
    %v486 = vadd.f32 %v318, %v485
    %v487 = vpop.f32.mrb[0].mxu0
    %488 = vmatprep.mubr.bf16.mxu0 0
    %489 = vmatmul.mubr.bf16.gmra.mrb[0].mxu0 %v295
    %v490 = vpop.f32.mrb[0].mxu0
    %v491 = vadd.f32 %v318, %v490
    %v492 = vpop.f32.mrb[0].mxu0
    %v493 = vpop.f32.mrb[0].mxu0
    %v494 = vadd.f32 %v318, %v493
    %v495 = vpop.f32.mrb[0].mxu0
    %496 = vmatprep.mubr.bf16.mxu0 0
    %497 = vmatmul.mubr.bf16.gmra.mrb[0].mxu0 %v296
    %v498 = vpop.f32.mrb[0].mxu0
    %v499 = vadd.f32 %v318, %v498
    %v500 = vpop.f32.mrb[0].mxu0
    %v501 = vpop.f32.mrb[0].mxu0
    %v502 = vpop.f32.mrb[0].mxu0
    %503 = vdwg.mxu0
    %504 = vmax.xlane.f32.xlu0 %v403
    %v505 = vpop.xlane.xlu0 %504
    %506 = vmax.xlane.f32.xlu0 %v406
    %v507 = vpop.xlane.xlu0 %506
    %508 = vmax.xlane.f32.xlu0 %v411
    %v509 = vpop.xlane.xlu0 %508
    %510 = vmax.xlane.f32.xlu0 %v414
    %v511 = vpop.xlane.xlu0 %510
    %512 = vmax.xlane.f32.xlu0 %v419
    %v513 = vpop.xlane.xlu0 %512
    %514 = vmax.xlane.f32.xlu0 %v422
    %v515 = vpop.xlane.xlu0 %514
    %516 = vmax.xlane.f32.xlu0 %v427
    %v517 = vpop.xlane.xlu0 %516
    %518 = vmax.xlane.f32.xlu0 %v430
    %v519 = vpop.xlane.xlu0 %518
    %520 = vmax.xlane.f32.xlu0 %v435
    %v521 = vpop.xlane.xlu0 %520
    %522 = vmax.xlane.f32.xlu0 %v438
    %v523 = vpop.xlane.xlu0 %522
    %524 = vmax.xlane.f32.xlu0 %v443
    %v525 = vpop.xlane.xlu0 %524
    %526 = vmax.xlane.f32.xlu0 %v446
    %v527 = vpop.xlane.xlu0 %526
    %528 = vmax.xlane.f32.xlu0 %v451
    %v529 = vpop.xlane.xlu0 %528
    %530 = vmax.xlane.f32.xlu0 %v454
    %v531 = vpop.xlane.xlu0 %530
    %532 = vmax.xlane.f32.xlu0 %v459
    %v533 = vpop.xlane.xlu0 %532
    %534 = vmax.xlane.f32.xlu0 %v462
    %v535 = vpop.xlane.xlu0 %534
    %536 = vmax.xlane.f32.xlu0 %v467
    %v537 = vpop.xlane.xlu0 %536
    %538 = vmax.xlane.f32.xlu0 %v470
    %v539 = vpop.xlane.xlu0 %538
    %540 = vmax.xlane.f32.xlu0 %v475
    %v541 = vpop.xlane.xlu0 %540
    %542 = vmax.xlane.f32.xlu0 %v478
    %v543 = vpop.xlane.xlu0 %542
    %544 = vmax.xlane.f32.xlu0 %v483
    %v545 = vpop.xlane.xlu0 %544
    %546 = vmax.xlane.f32.xlu0 %v486
    %v547 = vpop.xlane.xlu0 %546
    %548 = vmax.xlane.f32.xlu0 %v491
    %v549 = vpop.xlane.xlu0 %548
    %550 = vmax.xlane.f32.xlu0 %v494
    %v551 = vpop.xlane.xlu0 %550
    %552 = vmax.xlane.f32.xlu0 %v499
    %v553 = vpop.xlane.xlu0 %552
    %v554 = vsub.f32 %v403, %v505
    %v555 = vsub.f32 %v406, %v507
    %v556 = vsub.f32 %v411, %v509
    %v557 = vsub.f32 %v414, %v511
    %v558 = vsub.f32 %v419, %v513
    %v559 = vsub.f32 %v422, %v515
    %v560 = vsub.f32 %v427, %v517
    %v561 = vsub.f32 %v430, %v519
    %v562 = vsub.f32 %v435, %v521
    %v563 = vsub.f32 %v438, %v523
    %v564 = vsub.f32 %v443, %v525
    %v565 = vsub.f32 %v446, %v527
    %v566 = vsub.f32 %v451, %v529
    %v567 = vsub.f32 %v454, %v531
    %v568 = vsub.f32 %v459, %v533
    %v569 = vsub.f32 %v462, %v535
    %v570 = vsub.f32 %v467, %v537
    %v571 = vsub.f32 %v470, %v539
    %v572 = vsub.f32 %v475, %v541
    %v573 = vsub.f32 %v478, %v543
    %v574 = vsub.f32 %v483, %v545
    %v575 = vsub.f32 %v486, %v547
    %v576 = vsub.f32 %v491, %v549
    %v577 = vsub.f32 %v494, %v551
    %v578 = vsub.f32 %v499, %v553
    %v579 = vmul.f32 %v554, 1.442695
    %v580 = vpow.pop %v579
    %v581 = vmul.f32 %v555, 1.442695
    %v582 = vpow.pop %v581
    %v583 = vmul.f32 %v556, 1.442695
    %v584 = vpow.pop %v583
    %v585 = vmul.f32 %v557, 1.442695
    %v586 = vpow.pop %v585
    %v587 = vmul.f32 %v558, 1.442695
    %v588 = vpow.pop %v587
    %v589 = vmul.f32 %v559, 1.442695
    %v590 = vpow.pop %v589
    %v591 = vmul.f32 %v560, 1.442695
    %v592 = vpow.pop %v591
    %v593 = vmul.f32 %v561, 1.442695
    %v594 = vpow.pop %v593
    %v595 = vmul.f32 %v562, 1.442695
    %v596 = vpow.pop %v595
    %v597 = vmul.f32 %v563, 1.442695
    %v598 = vpow.pop %v597
    %v599 = vmul.f32 %v564, 1.442695
    %v600 = vpow.pop %v599
    %v601 = vmul.f32 %v565, 1.442695
    %v602 = vpow.pop %v601
    %v603 = vmul.f32 %v566, 1.442695
    %v604 = vpow.pop %v603
    %v605 = vmul.f32 %v567, 1.442695
    %v606 = vpow.pop %v605
    %v607 = vmul.f32 %v568, 1.442695
    %v608 = vpow.pop %v607
    %v609 = vmul.f32 %v569, 1.442695
    %v610 = vpow.pop %v609
    %v611 = vmul.f32 %v570, 1.442695
    %v612 = vpow.pop %v611
    %v613 = vmul.f32 %v571, 1.442695
    %v614 = vpow.pop %v613
    %v615 = vmul.f32 %v572, 1.442695
    %v616 = vpow.pop %v615
    %v617 = vmul.f32 %v573, 1.442695
    %v618 = vpow.pop %v617
    %v619 = vmul.f32 %v574, 1.442695
    %v620 = vpow.pop %v619
    %v621 = vmul.f32 %v575, 1.442695
    %v622 = vpow.pop %v621
    %v623 = vmul.f32 %v576, 1.442695
    %v624 = vpow.pop %v623
    %v625 = vmul.f32 %v577, 1.442695
    %v626 = vpow.pop %v625
    %v627 = vmul.f32 %v578, 1.442695
    %v628 = vpow.pop %v627
    %629 = vadd.xlane.f32.xlu0 %v580
    %v630 = vpop.xlane.xlu0 %629
    %631 = vadd.xlane.f32.xlu0 %v582
    %v632 = vpop.xlane.xlu0 %631
    %633 = vadd.xlane.f32.xlu0 %v584
    %v634 = vpop.xlane.xlu0 %633
    %635 = vadd.xlane.f32.xlu0 %v586
    %v636 = vpop.xlane.xlu0 %635
    %637 = vadd.xlane.f32.xlu0 %v588
    %v638 = vpop.xlane.xlu0 %637
    %639 = vadd.xlane.f32.xlu0 %v590
    %v640 = vpop.xlane.xlu0 %639
    %641 = vadd.xlane.f32.xlu0 %v592
    %v642 = vpop.xlane.xlu0 %641
    %643 = vadd.xlane.f32.xlu0 %v594
    %v644 = vpop.xlane.xlu0 %643
    %645 = vadd.xlane.f32.xlu0 %v596
    %v646 = vpop.xlane.xlu0 %645
    %647 = vadd.xlane.f32.xlu0 %v598
    %v648 = vpop.xlane.xlu0 %647
    %649 = vadd.xlane.f32.xlu0 %v600
    %v650 = vpop.xlane.xlu0 %649
    %651 = vadd.xlane.f32.xlu0 %v602
    %v652 = vpop.xlane.xlu0 %651
    %653 = vadd.xlane.f32.xlu0 %v604
    %v654 = vpop.xlane.xlu0 %653
    %655 = vadd.xlane.f32.xlu0 %v606
    %v656 = vpop.xlane.xlu0 %655
    %657 = vadd.xlane.f32.xlu0 %v608
    %v658 = vpop.xlane.xlu0 %657
    %659 = vadd.xlane.f32.xlu0 %v610
    %v660 = vpop.xlane.xlu0 %659
    %661 = vadd.xlane.f32.xlu0 %v612
    %v662 = vpop.xlane.xlu0 %661
    %663 = vadd.xlane.f32.xlu0 %v614
    %v664 = vpop.xlane.xlu0 %663
    %665 = vadd.xlane.f32.xlu0 %v616
    %v666 = vpop.xlane.xlu0 %665
    %667 = vadd.xlane.f32.xlu0 %v618
    %v668 = vpop.xlane.xlu0 %667
    %669 = vadd.xlane.f32.xlu0 %v620
    %v670 = vpop.xlane.xlu0 %669
    %671 = vadd.xlane.f32.xlu0 %v622
    %v672 = vpop.xlane.xlu0 %671
    %673 = vadd.xlane.f32.xlu0 %v624
    %v674 = vpop.xlane.xlu0 %673
    %675 = vadd.xlane.f32.xlu0 %v626
    %v676 = vpop.xlane.xlu0 %675
    %677 = vadd.xlane.f32.xlu0 %v628
    %v678 = vpop.xlane.xlu0 %677
    %v679 = vrcp.pop %v630
    %v680 = vmul.f32 %v580, %v679
    %v681 = vrcp.pop %v632
    %v682 = vmul.f32 %v582, %v681
    %v683 = vrcp.pop %v634
    %v684 = vmul.f32 %v584, %v683
    %v685 = vrcp.pop %v636
    %v686 = vmul.f32 %v586, %v685
    %v687 = vrcp.pop %v638
    %v688 = vmul.f32 %v588, %v687
    %v689 = vrcp.pop %v640
    %v690 = vmul.f32 %v590, %v689
    %v691 = vrcp.pop %v642
    %v692 = vmul.f32 %v592, %v691
    %v693 = vrcp.pop %v644
    %v694 = vmul.f32 %v594, %v693
    %v695 = vrcp.pop %v646
    %v696 = vmul.f32 %v596, %v695
    %v697 = vrcp.pop %v648
    %v698 = vmul.f32 %v598, %v697
    %v699 = vrcp.pop %v650
    %v700 = vmul.f32 %v600, %v699
    %v701 = vrcp.pop %v652
    %v702 = vmul.f32 %v602, %v701
    %v703 = vrcp.pop %v654
    %v704 = vmul.f32 %v604, %v703
    %v705 = vrcp.pop %v656
    %v706 = vmul.f32 %v606, %v705
    %v707 = vrcp.pop %v658
    %v708 = vmul.f32 %v608, %v707
    %v709 = vrcp.pop %v660
    %v710 = vmul.f32 %v610, %v709
    %v711 = vrcp.pop %v662
    %v712 = vmul.f32 %v612, %v711
    %v713 = vrcp.pop %v664
    %v714 = vmul.f32 %v614, %v713
    %v715 = vrcp.pop %v666
    %v716 = vmul.f32 %v616, %v715
    %v717 = vrcp.pop %v668
    %v718 = vmul.f32 %v618, %v717
    %v719 = vrcp.pop %v670
    %v720 = vmul.f32 %v620, %v719
    %v721 = vrcp.pop %v672
    %v722 = vmul.f32 %v622, %v721
    %v723 = vrcp.pop %v674
    %v724 = vmul.f32 %v624, %v723
    %v725 = vrcp.pop %v676
    %v726 = vmul.f32 %v626, %v725
    %v727 = vrcp.pop %v678
    %v728 = vmul.f32 %v628, %v727
    %729 = vst [vmem:[#allocation2] sm:$0xff] %v680
    %730 = vst [vmem:[#allocation2 + $0x8] sm:$0xff] %v682
    %731 = vst [vmem:[#allocation2 + $0x10] sm:$0xff] %v684
    %732 = vst [vmem:[#allocation2 + $0x18] sm:$0xff] %v686
    %733 = vst [vmem:[#allocation2 + $0x20] sm:$0xff] %v688
    %734 = vst [vmem:[#allocation2 + $0x28] sm:$0xff] %v690
    %735 = vst [vmem:[#allocation2 + $0x30] sm:$0xff] %v692
    %736 = vst [vmem:[#allocation2 + $0x38] sm:$0xff] %v694
    %737 = vst [vmem:[#allocation2 + $0x40] sm:$0xff] %v696
    %738 = vst [vmem:[#allocation2 + $0x48] sm:$0xff] %v698
    %739 = vst [vmem:[#allocation2 + $0x50] sm:$0xff] %v700
    %740 = vst [vmem:[#allocation2 + $0x58] sm:$0xff] %v702
    %741 = vst [vmem:[#allocation2 + $0x60] sm:$0xff] %v704
    %742 = vst [vmem:[#allocation2 + $0x68] sm:$0xff] %v706
    %743 = vst [vmem:[#allocation2 + $0x70] sm:$0xff] %v708
    %744 = vst [vmem:[#allocation2 + $0x78] sm:$0xff] %v710
    %745 = vst [vmem:[#allocation2 + $0x80] sm:$0xff] %v712
    %746 = vst [vmem:[#allocation2 + $0x88] sm:$0xff] %v714
    %747 = vst [vmem:[#allocation2 + $0x90] sm:$0xff] %v716
    %748 = vst [vmem:[#allocation2 + $0x98] sm:$0xff] %v718
    %749 = vst [vmem:[#allocation2 + $0xa0] sm:$0xff] %v720
    %750 = vst [vmem:[#allocation2 + $0xa8] sm:$0xff] %v722
    %751 = vst [vmem:[#allocation2 + $0xb0] sm:$0xff] %v724
    %752 = vst [vmem:[#allocation2 + $0xb8] sm:$0xff] %v726
    %753 = vst [vmem:[#allocation2 + $0xc0] sm:$0xff] %v728
    // Predicated region
    $region22: #{tpu_custom_call.1} parent=1 // pred_check
      _
    $region23: #{tpu_custom_call.1} parent=1 // pred_check_branch
      %755 = sbr.rel (0) target = $region25
    $region24: #{tpu_custom_call.1} parent=1 // pred_region
      %s757 = ssub.s32 3200, 3200
      %758 = vsyncadd [#allocation3], %s757
      %s759 = sshll.u32 [#allocation2], 4
      %s760 = int_to_ptr.vmem [resolvable:$true] %s759
      %765 = dma.vmem_to_hbm [thread:$0]  %s760, 3200, %s5, [#allocation3], 128, 128, 8
    $region25: #{tpu_custom_call.1} parent=1 // pred_fallthru
      _
    // Predicated region
    $region26: #{tpu_custom_call.1} parent=1 // pred_check
      _
    $region27: #{tpu_custom_call.1} parent=1 // pred_check_branch
      %767 = sbr.rel (0) target = $region29
    $region28: #{tpu_custom_call.1} parent=1 // pred_region
      %768 = dma.done [#allocation3], 3200
    $region29: #{tpu_custom_call.1} parent=1 // pred_fallthru
      _
    %769 = vsyncpa [#allocation3], 1

</llo_original>
